<compile_context>
chip_gen: v6e
topology: v6e:2x2x1
jax: 0.10.0
libtpu: 0.0.40
codegen_flags: <defaults>
</compile_context>

<pallas_src>
import jax
import jax.numpy as jnp
from jax.experimental import pallas as pl
from jax.experimental.pallas import tpu as pltpu

_LANE = 128


def _transition_kernel(x_ref, scale_ref, shift_ref, w_ref, o_ref):
    # x_ref:     [TH, W, Cin]        one H-tile of one batch element (NHWC)
    # scale_ref: [1, Cin]   f32      folded BN scale = gamma / sqrt(var + eps)
    # shift_ref: [1, Cin]   f32      folded BN shift = beta - mean * scale
    # w_ref:     [Cin, Cout_p] bf16  1x1 conv weight * 0.25, Cout padded to 128
    # o_ref:     [TH//2, W//2, Cout_p]
    TH, W, Cin = x_ref.shape
    Cout_p = w_ref.shape[1]
    TH2, W2 = TH // 2, W // 2

    scale = scale_ref[...].reshape(1, 1, Cin)
    shift = shift_ref[...].reshape(1, 1, Cin)

    # Fused BN(eval) + ReLU + H-pair pool sum.  The H split is a leading-dim
    # reshape (cheap) and BN/ReLU is applied per half, so the full-tile f32
    # activation is never materialized.  Elementwise math stays f32 on the VPU
    # (v5e has no bf16 VPU).
    x = x_ref[...].reshape(TH2, 2, W, Cin)
    y0 = jnp.maximum(x[:, 0].astype(jnp.float32) * scale + shift, 0.0)
    y1 = jnp.maximum(x[:, 1].astype(jnp.float32) * scale + shift, 0.0)
    yh = y0 + y1                                               # [TH2, W, Cin]

    # W-pair pool sum.  The 1/4 normalization is pre-folded into the conv
    # weight in the wrapper, so no extra scaling pass is needed here.
    yw = yh.reshape(TH2, W2, 2, Cin)
    yp = yw[:, :, 0, :] + yw[:, :, 1, :]                       # [TH2, W2, Cin]

    # 1x1 conv == channel matmul on the MXU: bf16 operands, f32 accumulation.
    z = jnp.dot(yp.reshape(TH2 * W2, Cin).astype(jnp.bfloat16), w_ref[...],
                preferred_element_type=jnp.float32)            # [m, Cout_p]
    o_ref[...] = z.reshape(TH2, W2, Cout_p).astype(o_ref.dtype)


def _vmem_capacity_bytes():
    """Per-core VMEM capacity, with a conservative fallback (v7x = 64 MiB)."""
    try:
        return int(pltpu.get_tpu_info().vmem_capacity_bytes)
    except Exception:
        return 64 << 20


def _step_vmem_bytes(th, W, Cin, Cout_p, in_isz, out_isz):
    """Approximate per-grid-step VMEM footprint: double-buffered input and
    output tiles, (double-buffered) constants, and the kernel's f32 temps."""
    inp = 2 * th * W * Cin * in_isz
    outp = 2 * (th // 2) * (W // 2) * Cout_p * out_isz
    const = 2 * (Cin * Cout_p * 2 + 2 * Cin * 4)
    tmp = 2 * (th // 2) * W * Cin * 4
    return inp + outp + const + tmp


def _pick_h_tile(H, W, Cin, Cout_p, in_isz, out_isz, n_batch, budget_bytes):
    """Largest even H-tile whose per-step VMEM footprint fits `budget_bytes`,
    biased towards (a) a 'parallel' grid product >= 2 (and even when the grid
    is short) so both v7x TensorCores stay fed, and (b) few grid steps with
    little H padding (trades ~0.35 us/step overhead against padded rows)."""
    cands = []
    for th in range(2, max(H, 2) + 1, 2):
        if _step_vmem_bytes(th, W, Cin, Cout_p, in_isz, out_isz) > budget_bytes:
            break
        cands.append(th)
    if not cands:
        return 2

    row_bytes = max(1, W * Cin * in_isz)
    overhead_rows = max(1, -(-350_000 // row_bytes))   # ~0.35us step overhead

    def score(th):
        nblk = -(-H // th)                 # H is padded to nblk*th in wrapper
        steps = n_batch * nblk
        even_ok = (steps % 2 == 0) or (steps > 8)
        cost = nblk * (overhead_rows + th)  # step overhead + padded HBM rows
        return (steps >= 2, even_ok, -cost, th)

    return max(cands, key=score)


def transition_forward_nhwc(x_nhwc, gamma, beta, running_mean, running_var,
                            conv_weight, eps=1e-5, out_dtype=None):
    """x_nhwc: [N, H, W, Cin]; conv_weight: [Cout, Cin, 1, 1] (PyTorch layout).
    Returns [N, H//2, W//2, Cout] in NHWC.  Pass out_dtype=jnp.bfloat16 when
    chaining transitions to halve HBM write traffic (kernel is HBM-bound)."""
    N, H, W, Cin = x_nhwc.shape
    Cout = conv_weight.shape[0]
    assert H % 2 == 0 and W % 2 == 0
    out_dtype = x_nhwc.dtype if out_dtype is None else jnp.dtype(out_dtype)

    # Fold BN running stats into per-channel scale/shift (eval-mode BN), f32.
    scale = (gamma.astype(jnp.float32)
             / jnp.sqrt(running_var.astype(jnp.float32) + eps))
    shift = beta.astype(jnp.float32) - running_mean.astype(jnp.float32) * scale
    scale = scale.reshape(1, Cin)
    shift = shift.reshape(1, Cin)

    # 1x1 conv weight -> [Cin, Cout]; fold the 2x2-avg-pool 1/4 (exact, power
    # of two) into it; lane-pad Cout to 128 for lane-dense output stores.
    Cout_p = -(-Cout // _LANE) * _LANE
    w = conv_weight.reshape(Cout, Cin).astype(jnp.float32).T * 0.25
    w = jnp.pad(w, ((0, 0), (0, Cout_p - Cout))).astype(jnp.bfloat16)

    in_isz = x_nhwc.dtype.itemsize
    out_isz = jnp.dtype(out_dtype).itemsize

    # Generation-aware VMEM budgeting (v7x: 64 MiB -> ~21 MiB/step budget;
    # v5e/v6e: 128 MiB -> 40 MiB/step budget).
    vmem_cap = _vmem_capacity_bytes()
    budget = min(vmem_cap // 3, 40 << 20)
    TH = _pick_h_tile(H, W, Cin, Cout_p, in_isz, out_isz, N, budget)
    footprint = _step_vmem_bytes(TH, W, Cin, Cout_p, in_isz, out_isz)
    vmem_limit = int(min(max(footprint + (8 << 20), 32 << 20),
                         (vmem_cap * 3) // 4))

    # Pad H to a multiple of TH.  Since H and TH are even, the pad rows form
    # whole pooling pairs that land in output rows >= H//2 and are sliced off,
    # so this is exact.
    # TODO(synk): a @pl.when-guarded ragged tail would avoid this extra HBM
    # pass for pathological H; zero-padding keeps the kernel simple.
    n_h = -(-H // TH)
    H_pad = n_h * TH
    if H_pad != H:
        x_nhwc = jnp.pad(x_nhwc, ((0, 0), (0, H_pad - H), (0, 0), (0, 0)))

    grid = (N, n_h)

    cost = pl.CostEstimate(
        flops=2 * N * (H_pad // 2) * (W // 2) * Cin * Cout,
        transcendentals=0,
        bytes_accessed=(N * H_pad * W * Cin * in_isz
                        + Cin * Cout_p * 2 + 2 * Cin * 4
                        + N * (H_pad // 2) * (W // 2) * Cout_p * out_isz),
    )

    out = pl.pallas_call(
        _transition_kernel,
        out_shape=jax.ShapeDtypeStruct((N, H_pad // 2, W // 2, Cout_p),
                                       out_dtype),
        grid_spec=pltpu.PrefetchScalarGridSpec(
            num_scalar_prefetch=0,
            grid=grid,
            in_specs=[
                pl.BlockSpec((None, TH, W, Cin), lambda n, h: (n, h, 0, 0)),
                pl.BlockSpec((1, Cin), lambda n, h: (0, 0)),
                pl.BlockSpec((1, Cin), lambda n, h: (0, 0)),
                pl.BlockSpec((Cin, Cout_p), lambda n, h: (0, 0)),
            ],
            out_specs=pl.BlockSpec((None, TH // 2, W // 2, Cout_p),
                                   lambda n, h: (n, h, 0, 0)),
        ),
        compiler_params=pltpu.CompilerParams(
            dimension_semantics=("parallel", "parallel"),
            vmem_limit_bytes=vmem_limit),
        cost_estimate=cost,
    )(x_nhwc, scale, shift, w)

    # Drop the H pad and the Cout lane pad (fuses with the boundary transpose).
    return out[:, :H // 2, :, :Cout]


def transition_forward(x_nchw, gamma, beta, running_mean, running_var,
                       conv_weight, eps=1e-5, out_dtype=None):
    """PyTorch NCHW boundary: [N, Cin, H, W] -> [N, Cout, H//2, W//2]."""
    x_nhwc = jnp.transpose(x_nchw, (0, 2, 3, 1))     # one transpose at entry
    out_nhwc = transition_forward_nhwc(x_nhwc, gamma, beta, running_mean,
                                       running_var, conv_weight, eps, out_dtype)
    return jnp.transpose(out_nhwc, (0, 3, 1, 2))     # one transpose at exit


def _reference(x_nchw, gamma, beta, running_mean, running_var, conv_weight,
               eps=1e-5):
    # Pure-JAX f32 reference mirroring PyTorch eval-mode semantics.
    Cin = x_nchw.shape[1]
    inv = gamma / jnp.sqrt(running_var + eps)
    scale = inv.reshape(1, Cin, 1, 1)
    shift = (beta - running_mean * inv).reshape(1, Cin, 1, 1)
    y = jnp.maximum(x_nchw * scale + shift, 0.0)
    w = conv_weight.reshape(conv_weight.shape[0], Cin)          # [Cout, Cin]
    z = jnp.einsum('nchw,oc->nohw', y, w)
    N, Co, H, W = z.shape
    return z.reshape(N, Co, H // 2, 2, W // 2, 2).mean(axis=(3, 5))


def _check(N, Cin, Cout, H, W, atol=5e-2, rtol=5e-2):
    key = jax.random.PRNGKey(0)
    kx, kg, kb, km, kv, kw = jax.random.split(key, 6)

    x = jax.random.normal(kx, (N, Cin, H, W), dtype=jnp.float32)
    gamma = jax.random.normal(kg, (Cin,), dtype=jnp.float32) * 0.1 + 1.0
    beta = jax.random.normal(kb, (Cin,), dtype=jnp.float32) * 0.1
    running_mean = jax.random.normal(km, (Cin,), dtype=jnp.float32) * 0.1
    running_var = jnp.abs(jax.random.normal(kv, (Cin,), dtype=jnp.float32)) + 1.0
    conv_weight = jax.random.normal(kw, (Cout, Cin, 1, 1), dtype=jnp.float32) * 0.1

    out = transition_forward(x, gamma, beta, running_mean, running_var,
                             conv_weight)
    out = jax.block_until_ready(out)

    ref = _reference(x, gamma, beta, running_mean, running_var, conv_weight)
    assert out.shape == (N, Cout, H // 2, W // 2), out.shape
    # Tolerance accounts for the bf16 MXU operands vs. the f32 reference.
    assert jnp.allclose(out, ref, atol=atol, rtol=rtol), \
        float(jnp.max(jnp.abs(out - ref)))


if __name__ == "__main__":
    # Small shape matching the module's Transition contract (Cout lane-padded
    # path, grid = (2, 1)).
    _check(N=2, Cin=8, Cout=4, H=16, W=16)
    # Lane-aligned shape exercising the H-tiled grid path (grid = (1, 2)).
    _check(N=1, Cin=256, Cout=128, H=32, W=32)
    print("KERNEL_OK")
</pallas_src>

<mosaic_0001>
module attributes {stable_mosaic.version = 11 : i64} {
  func.func @_transition_kernel(%arg0: i32, %arg1: i32, %arg2: memref<1x16x16x8xf32, #tpu.memory_space<vmem>>, %arg3: memref<1x8xf32, #tpu.memory_space<vmem>>, %arg4: memref<1x8xf32, #tpu.memory_space<vmem>>, %arg5: memref<8x128xbf16, #tpu.memory_space<vmem>>, %arg6: memref<1x8x8x128xf32, #tpu.memory_space<vmem>>) attributes {dimension_semantics = [#tpu.dimension_semantics<parallel>, #tpu.dimension_semantics<parallel>], iteration_bounds = array<i64: 2, 1>, scalar_prefetch = 0 : i64, scratch_operands = 0 : i64, tpu.core_type = #tpu.core_type<tc>, window_params = [{transform_indices = @transform_0, window_bounds = array<i64: 1, 16, 16, 8>}, {pipeline_mode = #tpu.pipeline_mode<synchronous>, transform_indices = @transform_1, window_bounds = array<i64: 1, 8>}, {pipeline_mode = #tpu.pipeline_mode<synchronous>, transform_indices = @transform_2, window_bounds = array<i64: 1, 8>}, {pipeline_mode = #tpu.pipeline_mode<synchronous>, transform_indices = @transform_3, window_bounds = array<i64: 8, 128>}, {transform_indices = @transform_4, window_bounds = array<i64: 1, 8, 8, 128>}]} {
    %c0 = arith.constant 0 : index
    %c0_0 = arith.constant 0 : index
    %0 = vector.load %arg3[%c0, %c0_0] : memref<1x8xf32, #tpu.memory_space<vmem>>, vector<1x8xf32>
    %1 = vector.shape_cast %0 : vector<1x8xf32> to vector<1x1x8xf32>
    %c0_1 = arith.constant 0 : index
    %c0_2 = arith.constant 0 : index
    %2 = vector.load %arg4[%c0_1, %c0_2] : memref<1x8xf32, #tpu.memory_space<vmem>>, vector<1x8xf32>
    %3 = vector.shape_cast %2 : vector<1x8xf32> to vector<1x1x8xf32>
    %c0_3 = arith.constant 0 : index
    %c0_4 = arith.constant 0 : index
    %c0_5 = arith.constant 0 : index
    %c0_6 = arith.constant 0 : index
    %4 = vector.load %arg2[%c0_3, %c0_4, %c0_5, %c0_6] : memref<1x16x16x8xf32, #tpu.memory_space<vmem>>, vector<1x16x16x8xf32>
    %5 = vector.shape_cast %4 : vector<1x16x16x8xf32> to vector<16x16x8xf32>
    %6 = vector.shape_cast %5 : vector<16x16x8xf32> to vector<8x2x16x8xf32>
    %7 = vector.extract_strided_slice %6 {offsets = [0, 0, 0, 0], sizes = [8, 1, 16, 8], strides = [1, 1, 1, 1]} : vector<8x2x16x8xf32> to vector<8x1x16x8xf32>
    %8 = vector.shape_cast %7 : vector<8x1x16x8xf32> to vector<8x16x8xf32>
    %9 = vector.broadcast %1 : vector<1x1x8xf32> to vector<8x16x8xf32>
    %10 = arith.mulf %8, %9 : vector<8x16x8xf32>
    %11 = vector.broadcast %3 : vector<1x1x8xf32> to vector<8x16x8xf32>
    %12 = arith.addf %10, %11 : vector<8x16x8xf32>
    %cst = arith.constant 0.000000e+00 : f32
    %13 = vector.broadcast %cst : f32 to vector<8x16x8xf32>
    %14 = arith.maximumf %12, %13 : vector<8x16x8xf32>
    %15 = vector.extract_strided_slice %6 {offsets = [0, 1, 0, 0], sizes = [8, 1, 16, 8], strides = [1, 1, 1, 1]} : vector<8x2x16x8xf32> to vector<8x1x16x8xf32>
    %16 = vector.shape_cast %15 : vector<8x1x16x8xf32> to vector<8x16x8xf32>
    %17 = vector.broadcast %1 : vector<1x1x8xf32> to vector<8x16x8xf32>
    %18 = arith.mulf %16, %17 : vector<8x16x8xf32>
    %19 = vector.broadcast %3 : vector<1x1x8xf32> to vector<8x16x8xf32>
    %20 = arith.addf %18, %19 : vector<8x16x8xf32>
    %cst_7 = arith.constant 0.000000e+00 : f32
    %21 = vector.broadcast %cst_7 : f32 to vector<8x16x8xf32>
    %22 = arith.maximumf %20, %21 : vector<8x16x8xf32>
    %23 = arith.addf %14, %22 : vector<8x16x8xf32>
    %24 = vector.shape_cast %23 : vector<8x16x8xf32> to vector<8x8x2x8xf32>
    %25 = vector.extract_strided_slice %24 {offsets = [0, 0, 0, 0], sizes = [8, 8, 1, 8], strides = [1, 1, 1, 1]} : vector<8x8x2x8xf32> to vector<8x8x1x8xf32>
    %26 = vector.shape_cast %25 : vector<8x8x1x8xf32> to vector<8x8x8xf32>
    %27 = vector.extract_strided_slice %24 {offsets = [0, 0, 1, 0], sizes = [8, 8, 1, 8], strides = [1, 1, 1, 1]} : vector<8x8x2x8xf32> to vector<8x8x1x8xf32>
    %28 = vector.shape_cast %27 : vector<8x8x1x8xf32> to vector<8x8x8xf32>
    %29 = arith.addf %26, %28 : vector<8x8x8xf32>
    %30 = vector.shape_cast %29 : vector<8x8x8xf32> to vector<64x8xf32>
    %31 = arith.truncf %30 : vector<64x8xf32> to vector<64x8xbf16>
    %c0_8 = arith.constant 0 : index
    %c0_9 = arith.constant 0 : index
    %32 = vector.load %arg5[%c0_8, %c0_9] : memref<8x128xbf16, #tpu.memory_space<vmem>>, vector<8x128xbf16>
    %cst_10 = arith.constant dense<0.000000e+00> : vector<64x128xf32>
    %33 = tpu.matmul %31, %32, %cst_10 {dimension_numbers = #tpu.dot_dimension_numbers<[1], [0], [0], [1], [0, 0, 1, 1], [], []>} : vector<64x8xbf16>, vector<8x128xbf16>, vector<64x128xf32> -> vector<64x128xf32>
    %34 = vector.shape_cast %33 : vector<64x128xf32> to vector<8x8x128xf32>
    %c0_11 = arith.constant 0 : index
    %c0_12 = arith.constant 0 : index
    %c0_13 = arith.constant 0 : index
    %c0_14 = arith.constant 0 : index
    %35 = vector.load %arg6[%c0_11, %c0_12, %c0_13, %c0_14] : memref<1x8x8x128xf32, #tpu.memory_space<vmem>>, vector<1x8x8x128xf32>
    %36 = vector.shape_cast %35 : vector<1x8x8x128xf32> to vector<8x8x128xf32>
    %37 = vector.shape_cast %34 : vector<8x8x128xf32> to vector<1x8x8x128xf32>
    tpu.vector_store %arg6[%c0_11, %c0_12, %c0_13, %c0_14], %37 {strides = array<i32>} : memref<1x8x8x128xf32, #tpu.memory_space<vmem>>, vector<1x8x8x128xf32>,
    return
  }
  func.func @transform_0(%arg0: i32, %arg1: i32) -> (i32, i32, i32, i32) {
    %c0_i32 = arith.constant 0 : i32
    %c0_i32_0 = arith.constant 0 : i32
    %c0_i32_1 = arith.constant 0 : i32
    return %arg0, %arg1, %c0_i32, %c0_i32_0 : i32, i32, i32, i32
  }
  func.func @transform_1(%arg0: i32, %arg1: i32) -> (i32, i32) {
    %c0_i32 = arith.constant 0 : i32
    %c0_i32_0 = arith.constant 0 : i32
    %c0_i32_1 = arith.constant 0 : i32
    return %c0_i32, %c0_i32_0 : i32, i32
  }
  func.func @transform_2(%arg0: i32, %arg1: i32) -> (i32, i32) {
    %c0_i32 = arith.constant 0 : i32
    %c0_i32_0 = arith.constant 0 : i32
    %c0_i32_1 = arith.constant 0 : i32
    return %c0_i32, %c0_i32_0 : i32, i32
  }
  func.func @transform_3(%arg0: i32, %arg1: i32) -> (i32, i32) {
    %c0_i32 = arith.constant 0 : i32
    %c0_i32_0 = arith.constant 0 : i32
    %c0_i32_1 = arith.constant 0 : i32
    return %c0_i32, %c0_i32_0 : i32, i32
  }
  func.func @transform_4(%arg0: i32, %arg1: i32) -> (i32, i32, i32, i32) {
    %c0_i32 = arith.constant 0 : i32
    %c0_i32_0 = arith.constant 0 : i32
    %c0_i32_1 = arith.constant 0 : i32
    return %arg0, %arg1, %c0_i32, %c0_i32_0 : i32, i32, i32, i32
  }
}

</mosaic_0001>

<llo_original>
// kernel: tpu_custom_call.1
$region0: #{tpu_custom_call.1}
  #allocation0 [shape = 'u32[]', space=smem, size = 0x4, offset = 0x4, fixed_abs, tag = 'smem constant byte address 0x4 - core index']
  #allocation1 [shape = 'u32[144,128]{1,0:T(1,128)}', space=vmem, size = 0x12000, scoped, tag = 'internal scratch']
  %s0 = inlined_call_operand.vmem [shape: f32[2,16,16,8], index: 0, kind: input, shape index: {}]
  %s1 = inlined_call_operand.vmem [shape: f32[1,8], index: 1, kind: input, shape index: {}]
  %s2 = inlined_call_operand.vmem [shape: f32[1,8], index: 2, kind: input, shape index: {}]
  %s3 = inlined_call_operand.vmem [shape: bf16[8,128], index: 3, kind: input, shape index: {}]
  %s4 = inlined_call_operand.hbm [shape: f32[2,8,8,128], index: 4, kind: output, shape index: {}]
  %s5 = sld [smem:[#allocation0]]
  $region49: #{tpu_custom_call.1} parent=0
    _
  %s7 = ssub.s32 1, %s5
  %s8 = scalar_select 0, %s7, %s5
  $region1: #{tpu_custom_call.1} parent=0
    #allocation2 [shape = 'u8[65536]{0}', space=vmem, size = 0x10000, scoped, tag = 'output window, operand 0']
    #allocation3 [shape = 's32[2]{0}', space=sflag, size = 0x8, scoped, tag = 'scoped memory for tpu_custom_call.1']
    %9 = vsyncpa [#allocation3], 0
    %s10 = scalar_lea.sflag [#allocation3], 1
    %11 = vsyncpa %s10, 0
    loop: start=0, step=1, limit=4
    $region2: #{tpu_custom_call.1} parent=1 // loop_pre_header
      _
    $region3: #{tpu_custom_call.1} parent=1 // loop_header
      %s13 = sphi 0, %s17
      %p14 = scmp.ge.s32.totalorder %s13, 4
      %s20 = sphi 0, %s32
      %s21 = sphi 0, %s28
      %s22 = sphi 0, %s20
      %s23 = sphi 0, %s21
      %s24 = sphi 0, %s22
      %s25 = sphi 0, %s23
      %s37 = sphi 0, %s39
      %s40 = sphi 0, %s37
      %s41 = sphi 0, %s40
      %s57 = sphi 0, %s41
      %s61 = sphi 0, %s61
      %s63 = sphi 0, %s61
      %s64 = sphi 0, %s63
      %s78 = sphi 0, %s64
      %s82 = sphi 0, %s82
      %s84 = sphi 0, %s82
      %s85 = sphi 0, %s84
      %s99 = sphi 0, %s85
      %s103 = sphi 0, %s103
      %s105 = sphi 0, %s103
      %s106 = sphi 0, %s105
      %s120 = sphi 0, %s106
      %s128 = sphi 0, %s130
      %s131 = sphi 0, %s128
      %s132 = sphi 0, %s131
      %s148 = sphi 0, %s132
    $region4: #{tpu_custom_call.1} parent=1 // loop_header_branch
      %16 = sbr.rel (%p14) target = $region8
    $region5: #{tpu_custom_call.1} parent=1 // loop_body
      %s18 = ssub.s32 %s13, 1
      %s19 = ssub.s32 %s13, 2
      %s26 = sadd.s32 1, %s21
      %p27 = scmp.ge.s32.totalorder %s26, 1
      %s28 = scalar_select %p27, 0, %s26
      %s29 = sadd.s32 1, %s20
      %s30 = scalar_select %p27, %s29, %s20
      %p31 = scmp.ge.s32.totalorder %s30, 2
      %s32 = scalar_select %p31, 0, %s30
      %s33 = ssub.s32 %s20, %s32
      %s34 = ssub.s32 %s21, %s28
      %s35 = sor.u32 %s33, %s34
      %p36 = scmp.eq.s32.totalorder %s35, 0
      %s38 = sadd.s32 %s37, 1
      %s39 = scalar_select %p36, %s37, %s38
      %p42 = pneg %p36
      %p43 = scmp.eq.s32.totalorder %s13, 1
      %p44 = por %p42, %p43
      %p45 = scmp.ne.s32.totalorder %s37, %s40
      %p46 = scmp.eq.s32.totalorder %s13, 0
      %p47 = por %p45, %p46
      %p48 = scmp.ne.s32.totalorder %s37, %s40
      %p49 = scmp.eq.s32.totalorder %s18, 1
      %p50 = por %p48, %p49
      %p51 = scmp.ne.s32.totalorder %s40, %s41
      %p52 = scmp.eq.s32.totalorder %s18, 0
      %p53 = por %p51, %p52
      %p54 = scmp.ne.s32.totalorder %s40, %s41
      %p55 = scmp.eq.s32.totalorder %s19, 1
      %p56 = por %p54, %p55
      %p58 = scmp.ne.s32.totalorder %s41, %s57
      %p59 = scmp.eq.s32.totalorder %s19, 0
      %p60 = por %p58, %p59
      %s62 = sadd.s32 %s61, 1
      %p65 = scmp.eq.s32.totalorder %s13, 1
      %p66 = scmp.ne.s32.totalorder %s61, %s63
      %p67 = scmp.eq.s32.totalorder %s13, 0
      %p68 = por %p66, %p67
      %p69 = scmp.ne.s32.totalorder %s61, %s63
      %p70 = scmp.eq.s32.totalorder %s18, 1
      %p71 = por %p69, %p70
      %p72 = scmp.ne.s32.totalorder %s63, %s64
      %p73 = scmp.eq.s32.totalorder %s18, 0
      %p74 = por %p72, %p73
      %p75 = scmp.ne.s32.totalorder %s63, %s64
      %p76 = scmp.eq.s32.totalorder %s19, 1
      %p77 = por %p75, %p76
      %p79 = scmp.ne.s32.totalorder %s64, %s78
      %p80 = scmp.eq.s32.totalorder %s19, 0
      %p81 = por %p79, %p80
      %s83 = sadd.s32 %s82, 1
      %p86 = scmp.eq.s32.totalorder %s13, 1
      %p87 = scmp.ne.s32.totalorder %s82, %s84
      %p88 = scmp.eq.s32.totalorder %s13, 0
      %p89 = por %p87, %p88
      %p90 = scmp.ne.s32.totalorder %s82, %s84
      %p91 = scmp.eq.s32.totalorder %s18, 1
      %p92 = por %p90, %p91
      %p93 = scmp.ne.s32.totalorder %s84, %s85
      %p94 = scmp.eq.s32.totalorder %s18, 0
      %p95 = por %p93, %p94
      %p96 = scmp.ne.s32.totalorder %s84, %s85
      %p97 = scmp.eq.s32.totalorder %s19, 1
      %p98 = por %p96, %p97
      %p100 = scmp.ne.s32.totalorder %s85, %s99
      %p101 = scmp.eq.s32.totalorder %s19, 0
      %p102 = por %p100, %p101
      %s104 = sadd.s32 %s103, 1
      %p107 = scmp.eq.s32.totalorder %s13, 1
      %p108 = scmp.ne.s32.totalorder %s103, %s105
      %p109 = scmp.eq.s32.totalorder %s13, 0
      %p110 = por %p108, %p109
      %p111 = scmp.ne.s32.totalorder %s103, %s105
      %p112 = scmp.eq.s32.totalorder %s18, 1
      %p113 = por %p111, %p112
      %p114 = scmp.ne.s32.totalorder %s105, %s106
      %p115 = scmp.eq.s32.totalorder %s18, 0
      %p116 = por %p114, %p115
      %p117 = scmp.ne.s32.totalorder %s105, %s106
      %p118 = scmp.eq.s32.totalorder %s19, 1
      %p119 = por %p117, %p118
      %p121 = scmp.ne.s32.totalorder %s106, %s120
      %p122 = scmp.eq.s32.totalorder %s19, 0
      %p123 = por %p121, %p122
      %s124 = ssub.s32 %s20, %s32
      %s125 = ssub.s32 %s21, %s28
      %s126 = sor.u32 %s124, %s125
      %p127 = scmp.eq.s32.totalorder %s126, 0
      %s129 = sadd.s32 %s128, 1
      %s130 = scalar_select %p127, %s128, %s129
      %p133 = pneg %p127
      %p134 = scmp.eq.s32.totalorder %s13, 1
      %p135 = por %p133, %p134
      %p136 = scmp.ne.s32.totalorder %s128, %s131
      %p137 = scmp.eq.s32.totalorder %s13, 0
      %p138 = por %p136, %p137
      %p139 = scmp.ne.s32.totalorder %s128, %s131
      %p140 = scmp.eq.s32.totalorder %s18, 1
      %p141 = por %p139, %p140
      %p142 = scmp.ne.s32.totalorder %s131, %s132
      %p143 = scmp.eq.s32.totalorder %s18, 0
      %p144 = por %p142, %p143
      %p145 = scmp.ne.s32.totalorder %s131, %s132
      %p146 = scmp.eq.s32.totalorder %s19, 1
      %p147 = por %p145, %p146
      %p149 = scmp.ne.s32.totalorder %s132, %s148
      %p150 = scmp.eq.s32.totalorder %s19, 0
      %p151 = por %p149, %p150
      %p152 = scmp.le.s32.totalorder 1, %s13
      %p153 = scmp.lt.s32.totalorder %s13, 3
      %p154 = pnand %p152, %p153
      %p155 = pneg %p154
      // Predicated region
      $region9: #{tpu_custom_call.1} parent=5 // pred_check
        _
      $region10: #{tpu_custom_call.1} parent=5 // pred_check_branch
        %157 = sbr.rel (%p154) target = $region12
      $region11: #{tpu_custom_call.1} parent=5 // pred_region
        %s158 = ssub.s32 %s13, 1
        // Predicated region
        $region13: #{tpu_custom_call.1} parent=11 // pred_check
          %p159 = pneg %p74
        $region14: #{tpu_custom_call.1} parent=11 // pred_check_branch
          %161 = sbr.rel (%p159) target = $region16
        $region15: #{tpu_custom_call.1} parent=11 // pred_region
          _
        $region16: #{tpu_custom_call.1} parent=11 // pred_fallthru
          _
        // Predicated region
        $region17: #{tpu_custom_call.1} parent=11 // pred_check
          %p162 = pneg %p95
        $region18: #{tpu_custom_call.1} parent=11 // pred_check_branch
          %164 = sbr.rel (%p162) target = $region20
        $region19: #{tpu_custom_call.1} parent=11 // pred_region
          _
        $region20: #{tpu_custom_call.1} parent=11 // pred_fallthru
          _
        // Predicated region
        $region21: #{tpu_custom_call.1} parent=11 // pred_check
          %p165 = pneg %p116
        $region22: #{tpu_custom_call.1} parent=11 // pred_check_branch
          %167 = sbr.rel (%p165) target = $region24
        $region23: #{tpu_custom_call.1} parent=11 // pred_region
          _
        $region24: #{tpu_custom_call.1} parent=11 // pred_fallthru
          _
      $region12: #{tpu_custom_call.1} parent=5 // pred_fallthru
        _
      %p168 = scmp.lt.s32.totalorder %s13, 2
      // Predicated region
      $region25: #{tpu_custom_call.1} parent=5 // pred_check
        %p169 = pneg %p168
      $region26: #{tpu_custom_call.1} parent=5 // pred_check_branch
        %171 = sbr.rel (%p169) target = $region28
      $region27: #{tpu_custom_call.1} parent=5 // pred_region
        // Predicated region
        $region29: #{tpu_custom_call.1} parent=27 // pred_check
          %p172 = pneg %p47
        $region30: #{tpu_custom_call.1} parent=27 // pred_check_branch
          %174 = sbr.rel (%p172) target = $region32
        $region31: #{tpu_custom_call.1} parent=27 // pred_region
          %s175 = smul.u32 16, %s21
          %p176 = scmp.lt.s32.totalorder %s20, 1
          %s177 = scalar_select %p176, %s20, 1
          %p178 = scmp.lt.s32.totalorder %s175, 15
          %s179 = scalar_select %p178, %s175, 15
          %s180 = smul.addr %s179, 2
          %s181 = smul.addr %s177, 32
          %s182 = sadd.s32 %s180, %s181
          %s183 = smul.addr %s182, 8
          %s184 = scalar_lea.vmem %s0, %s183
          %s185 = smul.u32 16, %s21
        $region32: #{tpu_custom_call.1} parent=27 // pred_fallthru
          _
      $region28: #{tpu_custom_call.1} parent=5 // pred_fallthru
        _
      %p186 = scmp.le.s32.totalorder 1, %s13
      %p187 = scmp.lt.s32.totalorder %s13, 3
      %p188 = pnand %p186, %p187
      %p189 = pneg %p188
      // Predicated region
      $region33: #{tpu_custom_call.1} parent=5 // pred_check
        _
      $region34: #{tpu_custom_call.1} parent=5 // pred_check_branch
        %191 = sbr.rel (%p188) target = $region36
      $region35: #{tpu_custom_call.1} parent=5 // pred_region
        %s192 = ssub.s32 %s13, 1
        %s193 = smul.u32 16, %s23
        %p194 = scmp.lt.s32.totalorder %s22, 1
        %s195 = scalar_select %p194, %s22, 1
        %p196 = scmp.lt.s32.totalorder %s193, 15
        %s197 = scalar_select %p196, %s193, 15
        %s198 = smul.addr %s197, 2
        %s199 = smul.addr %s195, 32
        %s200 = sadd.s32 %s198, %s199
        %s201 = smul.addr %s200, 8
        %s202 = scalar_lea.vmem %s0, %s201
        %p203 = pneg %p53
        %p204 = pneg %p50
        %p205 = pneg %p74
        %p206 = pneg %p71
        %p207 = pneg %p95
        %p208 = pneg %p92
        %p209 = pneg %p116
        %p210 = pneg %p113
        %p211 = pneg %p144
        %p212 = pneg %p141
        %s213 = sand.u32 %s131, 1
        %s214 = scalar_lea.sflag [#allocation3], %s213
        %s215 = sand.u32 %s131, 1
        %s216 = smul.addr %s215, 64
        %s217 = scalar_lea.vmem [#allocation2], %s216
        %s218 = smul.u32 16, %s23
        %p219 = scmp.lt.s32.totalorder %s22, 1
        %s220 = scalar_select %p219, %s22, 1
        %p221 = scmp.lt.s32.totalorder %s218, 15
        %s222 = scalar_select %p221, %s218, 15
        %s223 = smul.addr %s222, 2
        %s224 = smul.addr %s220, 32
        %s225 = sadd.s32 %s223, %s224
        %s226 = smul.addr %s225, 8
        %s227 = scalar_lea.vmem %s0, %s226
        %s228 = smul.u32 16, %s23
        %s229 = smul.u32 8, %s23
        %v231 = vld [vmem:[%s1] sm:$0x1]
        %v232 = vld [vmem:[%s2] sm:$0x1]
        %v233 = vld [vmem:[%s227] sm:$0xff]
        %v234 = vld [vmem:[%s227 + $0x8] sm:$0xff]
        %v235 = vld [vmem:[%s227 + $0x10] sm:$0xff]
        %v236 = vld [vmem:[%s227 + $0x18] sm:$0xff]
        %v237 = vld [vmem:[%s227 + $0x20] sm:$0xff]
        %v238 = vld [vmem:[%s227 + $0x28] sm:$0xff]
        %v239 = vld [vmem:[%s227 + $0x30] sm:$0xff]
        %v240 = vld [vmem:[%s227 + $0x38] sm:$0xff]
        %v241 = vld [vmem:[%s227 + $0x40] sm:$0xff]
        %v242 = vld [vmem:[%s227 + $0x48] sm:$0xff]
        %v243 = vld [vmem:[%s227 + $0x50] sm:$0xff]
        %v244 = vld [vmem:[%s227 + $0x58] sm:$0xff]
        %v245 = vld [vmem:[%s227 + $0x60] sm:$0xff]
        %v246 = vld [vmem:[%s227 + $0x68] sm:$0xff]
        %v247 = vld [vmem:[%s227 + $0x70] sm:$0xff]
        %v248 = vld [vmem:[%s227 + $0x78] sm:$0xff]
        %v249 = vld [vmem:[%s227 + $0x80] sm:$0xff]
        %v250 = vld [vmem:[%s227 + $0x88] sm:$0xff]
        %v251 = vld [vmem:[%s227 + $0x90] sm:$0xff]
        %v252 = vld [vmem:[%s227 + $0x98] sm:$0xff]
        %v253 = vld [vmem:[%s227 + $0xa0] sm:$0xff]
        %v254 = vld [vmem:[%s227 + $0xa8] sm:$0xff]
        %v255 = vld [vmem:[%s227 + $0xb0] sm:$0xff]
        %v256 = vld [vmem:[%s227 + $0xb8] sm:$0xff]
        %v257 = vld [vmem:[%s227 + $0xc0] sm:$0xff]
        %v258 = vld [vmem:[%s227 + $0xc8] sm:$0xff]
        %v259 = vld [vmem:[%s227 + $0xd0] sm:$0xff]
        %v260 = vld [vmem:[%s227 + $0xd8] sm:$0xff]
        %v261 = vld [vmem:[%s227 + $0xe0] sm:$0xff]
        %v262 = vld [vmem:[%s227 + $0xe8] sm:$0xff]
        %v263 = vld [vmem:[%s227 + $0xf0] sm:$0xff]
        %v264 = vld [vmem:[%s227 + $0xf8] sm:$0xff]
        %v266 = vlaneseq
        %v267 = vshrl.u32 %v266, 7
        %v268 = vsub.s32 0, %v267
        %v269 = vrot.slane %v231, %v268
        %v271 = vmul.f32 %v233, %v269
        %v272 = vmul.f32 %v234, %v269
        %v273 = vmul.f32 %v237, %v269
        %v274 = vmul.f32 %v238, %v269
        %v275 = vmul.f32 %v241, %v269
        %v276 = vmul.f32 %v242, %v269
        %v277 = vmul.f32 %v245, %v269
        %v278 = vmul.f32 %v246, %v269
        %v279 = vmul.f32 %v249, %v269
        %v280 = vmul.f32 %v250, %v269
        %v281 = vmul.f32 %v253, %v269
        %v282 = vmul.f32 %v254, %v269
        %v283 = vmul.f32 %v257, %v269
        %v284 = vmul.f32 %v258, %v269
        %v285 = vmul.f32 %v261, %v269
        %v286 = vmul.f32 %v262, %v269
        %v288 = vlaneseq
        %v289 = vshrl.u32 %v288, 7
        %v290 = vsub.s32 0, %v289
        %v291 = vrot.slane %v232, %v290
        %v293 = vadd.f32 %v271, %v291
        %v294 = vadd.f32 %v272, %v291
        %v295 = vadd.f32 %v273, %v291
        %v296 = vadd.f32 %v274, %v291
        %v297 = vadd.f32 %v275, %v291
        %v298 = vadd.f32 %v276, %v291
        %v299 = vadd.f32 %v277, %v291
        %v300 = vadd.f32 %v278, %v291
        %v301 = vadd.f32 %v279, %v291
        %v302 = vadd.f32 %v280, %v291
        %v303 = vadd.f32 %v281, %v291
        %v304 = vadd.f32 %v282, %v291
        %v305 = vadd.f32 %v283, %v291
        %v306 = vadd.f32 %v284, %v291
        %v307 = vadd.f32 %v285, %v291
        %v308 = vadd.f32 %v286, %v291
        %v309 = vmax.f32 %v293, 0.0
        %v310 = vmax.f32 %v294, 0.0
        %v311 = vmax.f32 %v295, 0.0
        %v312 = vmax.f32 %v296, 0.0
        %v313 = vmax.f32 %v297, 0.0
        %v314 = vmax.f32 %v298, 0.0
        %v315 = vmax.f32 %v299, 0.0
        %v316 = vmax.f32 %v300, 0.0
        %v317 = vmax.f32 %v301, 0.0
        %v318 = vmax.f32 %v302, 0.0
        %v319 = vmax.f32 %v303, 0.0
        %v320 = vmax.f32 %v304, 0.0
        %v321 = vmax.f32 %v305, 0.0
        %v322 = vmax.f32 %v306, 0.0
        %v323 = vmax.f32 %v307, 0.0
        %v324 = vmax.f32 %v308, 0.0
        %v325 = vmul.f32 %v235, %v269
        %v326 = vmul.f32 %v236, %v269
        %v327 = vmul.f32 %v239, %v269
        %v328 = vmul.f32 %v240, %v269
        %v329 = vmul.f32 %v243, %v269
        %v330 = vmul.f32 %v244, %v269
        %v331 = vmul.f32 %v247, %v269
        %v332 = vmul.f32 %v248, %v269
        %v333 = vmul.f32 %v251, %v269
        %v334 = vmul.f32 %v252, %v269
        %v335 = vmul.f32 %v255, %v269
        %v336 = vmul.f32 %v256, %v269
        %v337 = vmul.f32 %v259, %v269
        %v338 = vmul.f32 %v260, %v269
        %v339 = vmul.f32 %v263, %v269
        %v340 = vmul.f32 %v264, %v269
        %v341 = vadd.f32 %v325, %v291
        %v342 = vadd.f32 %v326, %v291
        %v343 = vadd.f32 %v327, %v291
        %v344 = vadd.f32 %v328, %v291
        %v345 = vadd.f32 %v329, %v291
        %v346 = vadd.f32 %v330, %v291
        %v347 = vadd.f32 %v331, %v291
        %v348 = vadd.f32 %v332, %v291
        %v349 = vadd.f32 %v333, %v291
        %v350 = vadd.f32 %v334, %v291
        %v351 = vadd.f32 %v335, %v291
        %v352 = vadd.f32 %v336, %v291
        %v353 = vadd.f32 %v337, %v291
        %v354 = vadd.f32 %v338, %v291
        %v355 = vadd.f32 %v339, %v291
        %v356 = vadd.f32 %v340, %v291
        %v357 = vmax.f32 %v341, 0.0
        %v358 = vmax.f32 %v342, 0.0
        %v359 = vmax.f32 %v343, 0.0
        %v360 = vmax.f32 %v344, 0.0
        %v361 = vmax.f32 %v345, 0.0
        %v362 = vmax.f32 %v346, 0.0
        %v363 = vmax.f32 %v347, 0.0
        %v364 = vmax.f32 %v348, 0.0
        %v365 = vmax.f32 %v349, 0.0
        %v366 = vmax.f32 %v350, 0.0
        %v367 = vmax.f32 %v351, 0.0
        %v368 = vmax.f32 %v352, 0.0
        %v369 = vmax.f32 %v353, 0.0
        %v370 = vmax.f32 %v354, 0.0
        %v371 = vmax.f32 %v355, 0.0
        %v372 = vmax.f32 %v356, 0.0
        %v373 = vadd.f32 %v309, %v357
        %v374 = vadd.f32 %v310, %v358
        %v375 = vadd.f32 %v311, %v359
        %v376 = vadd.f32 %v312, %v360
        %v377 = vadd.f32 %v313, %v361
        %v378 = vadd.f32 %v314, %v362
        %v379 = vadd.f32 %v315, %v363
        %v380 = vadd.f32 %v316, %v364
        %v381 = vadd.f32 %v317, %v365
        %v382 = vadd.f32 %v318, %v366
        %v383 = vadd.f32 %v319, %v367
        %v384 = vadd.f32 %v320, %v368
        %v385 = vadd.f32 %v321, %v369
        %v386 = vadd.f32 %v322, %v370
        %v387 = vadd.f32 %v323, %v371
        %v388 = vadd.f32 %v324, %v372
        %v405 = vcombine.high %v373, %v373
        %v407 = vunpack.c.l.s4 1983009808
        %v408 = vunpack.c.0.s8 %v407
        %v409 = vlaneseq
        %v410 = vshrl.u32 %v409, 7
        %v411 = vsub.s32 %v408, %v410
        %v412 = vrot.slane %v373, %v411
        %v414 = vunpack.c.l.s4 1983009808
        %v415 = vunpack.c.0.s8 %v414
        %v416 = vlaneseq
        %v417 = vshrl.u32 %v416, 7
        %v418 = vsub.s32 %v415, %v417
        %v419 = vrot.slane %v405, %v418
        %v420 = vcombine.high %v412, %v412
        %v421 = vcombine.high %v419, %v419
        %v422 = vcombine.high %v374, %v374
        %v424 = vunpack.c.l.s4 1983009808
        %v425 = vunpack.c.0.s8 %v424
        %v426 = vlaneseq
        %v427 = vshrl.u32 %v426, 7
        %v428 = vsub.s32 %v425, %v427
        %v429 = vrot.slane %v374, %v428
        %v431 = vunpack.c.l.s4 1983009808
        %v432 = vunpack.c.0.s8 %v431
        %v433 = vlaneseq
        %v434 = vshrl.u32 %v433, 7
        %v435 = vsub.s32 %v432, %v434
        %v436 = vrot.slane %v422, %v435
        %v437 = vcombine.high %v429, %v429
        %v438 = vcombine.high %v436, %v436
        %v439 = vcombine.high %v375, %v375
        %v441 = vunpack.c.l.s4 1983009808
        %v442 = vunpack.c.0.s8 %v441
        %v443 = vlaneseq
        %v444 = vshrl.u32 %v443, 7
        %v445 = vsub.s32 %v442, %v444
        %v446 = vrot.slane %v375, %v445
        %v448 = vunpack.c.l.s4 1983009808
        %v449 = vunpack.c.0.s8 %v448
        %v450 = vlaneseq
        %v451 = vshrl.u32 %v450, 7
        %v452 = vsub.s32 %v449, %v451
        %v453 = vrot.slane %v439, %v452
        %v454 = vcombine.high %v446, %v446
        %v455 = vcombine.high %v453, %v453
        %v456 = vcombine.high %v376, %v376
        %v458 = vunpack.c.l.s4 1983009808
        %v459 = vunpack.c.0.s8 %v458
        %v460 = vlaneseq
        %v461 = vshrl.u32 %v460, 7
        %v462 = vsub.s32 %v459, %v461
        %v463 = vrot.slane %v376, %v462
        %v465 = vunpack.c.l.s4 1983009808
        %v466 = vunpack.c.0.s8 %v465
        %v467 = vlaneseq
        %v468 = vshrl.u32 %v467, 7
        %v469 = vsub.s32 %v466, %v468
        %v470 = vrot.slane %v456, %v469
        %v471 = vcombine.high %v463, %v463
        %v472 = vcombine.high %v470, %v470
        %v473 = vcombine.high %v377, %v377
        %v475 = vunpack.c.l.s4 1983009808
        %v476 = vunpack.c.0.s8 %v475
        %v477 = vlaneseq
        %v478 = vshrl.u32 %v477, 7
        %v479 = vsub.s32 %v476, %v478
        %v480 = vrot.slane %v377, %v479
        %v482 = vunpack.c.l.s4 1983009808
        %v483 = vunpack.c.0.s8 %v482
        %v484 = vlaneseq
        %v485 = vshrl.u32 %v484, 7
        %v486 = vsub.s32 %v483, %v485
        %v487 = vrot.slane %v473, %v486
        %v488 = vcombine.high %v480, %v480
        %v489 = vcombine.high %v487, %v487
        %v490 = vcombine.high %v378, %v378
        %v492 = vunpack.c.l.s4 1983009808
        %v493 = vunpack.c.0.s8 %v492
        %v494 = vlaneseq
        %v495 = vshrl.u32 %v494, 7
        %v496 = vsub.s32 %v493, %v495
        %v497 = vrot.slane %v378, %v496
        %v499 = vunpack.c.l.s4 1983009808
        %v500 = vunpack.c.0.s8 %v499
        %v501 = vlaneseq
        %v502 = vshrl.u32 %v501, 7
        %v503 = vsub.s32 %v500, %v502
        %v504 = vrot.slane %v490, %v503
        %v505 = vcombine.high %v497, %v497
        %v506 = vcombine.high %v504, %v504
        %v507 = vcombine.high %v379, %v379
        %v509 = vunpack.c.l.s4 1983009808
        %v510 = vunpack.c.0.s8 %v509
        %v511 = vlaneseq
        %v512 = vshrl.u32 %v511, 7
        %v513 = vsub.s32 %v510, %v512
        %v514 = vrot.slane %v379, %v513
        %v516 = vunpack.c.l.s4 1983009808
        %v517 = vunpack.c.0.s8 %v516
        %v518 = vlaneseq
        %v519 = vshrl.u32 %v518, 7
        %v520 = vsub.s32 %v517, %v519
        %v521 = vrot.slane %v507, %v520
        %v522 = vcombine.high %v514, %v514
        %v523 = vcombine.high %v521, %v521
        %v524 = vcombine.high %v380, %v380
        %v526 = vunpack.c.l.s4 1983009808
        %v527 = vunpack.c.0.s8 %v526
        %v528 = vlaneseq
        %v529 = vshrl.u32 %v528, 7
        %v530 = vsub.s32 %v527, %v529
        %v531 = vrot.slane %v380, %v530
        %v533 = vunpack.c.l.s4 1983009808
        %v534 = vunpack.c.0.s8 %v533
        %v535 = vlaneseq
        %v536 = vshrl.u32 %v535, 7
        %v537 = vsub.s32 %v534, %v536
        %v538 = vrot.slane %v524, %v537
        %v539 = vcombine.high %v531, %v531
        %v540 = vcombine.high %v538, %v538
        %v541 = vcombine.high %v381, %v381
        %v543 = vunpack.c.l.s4 1983009808
        %v544 = vunpack.c.0.s8 %v543
        %v545 = vlaneseq
        %v546 = vshrl.u32 %v545, 7
        %v547 = vsub.s32 %v544, %v546
        %v548 = vrot.slane %v381, %v547
        %v550 = vunpack.c.l.s4 1983009808
        %v551 = vunpack.c.0.s8 %v550
        %v552 = vlaneseq
        %v553 = vshrl.u32 %v552, 7
        %v554 = vsub.s32 %v551, %v553
        %v555 = vrot.slane %v541, %v554
        %v556 = vcombine.high %v548, %v548
        %v557 = vcombine.high %v555, %v555
        %v558 = vcombine.high %v382, %v382
        %v560 = vunpack.c.l.s4 1983009808
        %v561 = vunpack.c.0.s8 %v560
        %v562 = vlaneseq
        %v563 = vshrl.u32 %v562, 7
        %v564 = vsub.s32 %v561, %v563
        %v565 = vrot.slane %v382, %v564
        %v567 = vunpack.c.l.s4 1983009808
        %v568 = vunpack.c.0.s8 %v567
        %v569 = vlaneseq
        %v570 = vshrl.u32 %v569, 7
        %v571 = vsub.s32 %v568, %v570
        %v572 = vrot.slane %v558, %v571
        %v573 = vcombine.high %v565, %v565
        %v574 = vcombine.high %v572, %v572
        %v575 = vcombine.high %v383, %v383
        %v577 = vunpack.c.l.s4 1983009808
        %v578 = vunpack.c.0.s8 %v577
        %v579 = vlaneseq
        %v580 = vshrl.u32 %v579, 7
        %v581 = vsub.s32 %v578, %v580
        %v582 = vrot.slane %v383, %v581
        %v584 = vunpack.c.l.s4 1983009808
        %v585 = vunpack.c.0.s8 %v584
        %v586 = vlaneseq
        %v587 = vshrl.u32 %v586, 7
        %v588 = vsub.s32 %v585, %v587
        %v589 = vrot.slane %v575, %v588
        %v590 = vcombine.high %v582, %v582
        %v591 = vcombine.high %v589, %v589
        %v592 = vcombine.high %v384, %v384
        %v594 = vunpack.c.l.s4 1983009808
        %v595 = vunpack.c.0.s8 %v594
        %v596 = vlaneseq
        %v597 = vshrl.u32 %v596, 7
        %v598 = vsub.s32 %v595, %v597
        %v599 = vrot.slane %v384, %v598
        %v601 = vunpack.c.l.s4 1983009808
        %v602 = vunpack.c.0.s8 %v601
        %v603 = vlaneseq
        %v604 = vshrl.u32 %v603, 7
        %v605 = vsub.s32 %v602, %v604
        %v606 = vrot.slane %v592, %v605
        %v607 = vcombine.high %v599, %v599
        %v608 = vcombine.high %v606, %v606
        %v609 = vcombine.high %v385, %v385
        %v611 = vunpack.c.l.s4 1983009808
        %v612 = vunpack.c.0.s8 %v611
        %v613 = vlaneseq
        %v614 = vshrl.u32 %v613, 7
        %v615 = vsub.s32 %v612, %v614
        %v616 = vrot.slane %v385, %v615
        %v618 = vunpack.c.l.s4 1983009808
        %v619 = vunpack.c.0.s8 %v618
        %v620 = vlaneseq
        %v621 = vshrl.u32 %v620, 7
        %v622 = vsub.s32 %v619, %v621
        %v623 = vrot.slane %v609, %v622
        %v624 = vcombine.high %v616, %v616
        %v625 = vcombine.high %v623, %v623
        %v626 = vcombine.high %v386, %v386
        %v628 = vunpack.c.l.s4 1983009808
        %v629 = vunpack.c.0.s8 %v628
        %v630 = vlaneseq
        %v631 = vshrl.u32 %v630, 7
        %v632 = vsub.s32 %v629, %v631
        %v633 = vrot.slane %v386, %v632
        %v635 = vunpack.c.l.s4 1983009808
        %v636 = vunpack.c.0.s8 %v635
        %v637 = vlaneseq
        %v638 = vshrl.u32 %v637, 7
        %v639 = vsub.s32 %v636, %v638
        %v640 = vrot.slane %v626, %v639
        %v641 = vcombine.high %v633, %v633
        %v642 = vcombine.high %v640, %v640
        %v643 = vcombine.high %v387, %v387
        %v645 = vunpack.c.l.s4 1983009808
        %v646 = vunpack.c.0.s8 %v645
        %v647 = vlaneseq
        %v648 = vshrl.u32 %v647, 7
        %v649 = vsub.s32 %v646, %v648
        %v650 = vrot.slane %v387, %v649
        %v652 = vunpack.c.l.s4 1983009808
        %v653 = vunpack.c.0.s8 %v652
        %v654 = vlaneseq
        %v655 = vshrl.u32 %v654, 7
        %v656 = vsub.s32 %v653, %v655
        %v657 = vrot.slane %v643, %v656
        %v658 = vcombine.high %v650, %v650
        %v659 = vcombine.high %v657, %v657
        %v660 = vcombine.high %v388, %v388
        %v662 = vunpack.c.l.s4 1983009808
        %v663 = vunpack.c.0.s8 %v662
        %v664 = vlaneseq
        %v665 = vshrl.u32 %v664, 7
        %v666 = vsub.s32 %v663, %v665
        %v667 = vrot.slane %v388, %v666
        %v669 = vunpack.c.l.s4 1983009808
        %v670 = vunpack.c.0.s8 %v669
        %v671 = vlaneseq
        %v672 = vshrl.u32 %v671, 7
        %v673 = vsub.s32 %v670, %v672
        %v674 = vrot.slane %v660, %v673
        %v675 = vcombine.high %v667, %v667
        %v676 = vcombine.high %v674, %v674
        %v741 = vrot.slane %v412, 7
        %v742 = vrot.slane %v741, 2
        %v743 = vrot.slane %v420, 7
        %v744 = vrot.slane %v743, 2
        %v745 = vrot.slane %v419, 7
        %v746 = vrot.slane %v745, 2
        %v747 = vrot.slane %v421, 7
        %v748 = vrot.slane %v747, 2
        %v749 = vrot.slane %v429, 7
        %v750 = vrot.slane %v749, 2
        %v751 = vrot.slane %v437, 7
        %v752 = vrot.slane %v751, 2
        %v753 = vrot.slane %v436, 7
        %v754 = vrot.slane %v753, 2
        %v755 = vrot.slane %v438, 7
        %v756 = vrot.slane %v755, 2
        %v757 = vrot.slane %v446, 7
        %v758 = vrot.slane %v757, 2
        %v759 = vrot.slane %v454, 7
        %v760 = vrot.slane %v759, 2
        %v761 = vrot.slane %v453, 7
        %v762 = vrot.slane %v761, 2
        %v763 = vrot.slane %v455, 7
        %v764 = vrot.slane %v763, 2
        %v765 = vrot.slane %v463, 7
        %v766 = vrot.slane %v765, 2
        %v767 = vrot.slane %v471, 7
        %v768 = vrot.slane %v767, 2
        %v769 = vrot.slane %v470, 7
        %v770 = vrot.slane %v769, 2
        %v771 = vrot.slane %v472, 7
        %v772 = vrot.slane %v771, 2
        %v773 = vrot.slane %v480, 7
        %v774 = vrot.slane %v773, 2
        %v775 = vrot.slane %v488, 7
        %v776 = vrot.slane %v775, 2
        %v777 = vrot.slane %v487, 7
        %v778 = vrot.slane %v777, 2
        %v779 = vrot.slane %v489, 7
        %v780 = vrot.slane %v779, 2
        %v781 = vrot.slane %v497, 7
        %v782 = vrot.slane %v781, 2
        %v783 = vrot.slane %v505, 7
        %v784 = vrot.slane %v783, 2
        %v785 = vrot.slane %v504, 7
        %v786 = vrot.slane %v785, 2
        %v787 = vrot.slane %v506, 7
        %v788 = vrot.slane %v787, 2
        %v789 = vrot.slane %v514, 7
        %v790 = vrot.slane %v789, 2
        %v791 = vrot.slane %v522, 7
        %v792 = vrot.slane %v791, 2
        %v793 = vrot.slane %v521, 7
        %v794 = vrot.slane %v793, 2
        %v795 = vrot.slane %v523, 7
        %v796 = vrot.slane %v795, 2
        %v797 = vrot.slane %v531, 7
        %v798 = vrot.slane %v797, 2
        %v799 = vrot.slane %v539, 7
        %v800 = vrot.slane %v799, 2
        %v801 = vrot.slane %v538, 7
        %v802 = vrot.slane %v801, 2
        %v803 = vrot.slane %v540, 7
        %v804 = vrot.slane %v803, 2
        %v805 = vrot.slane %v548, 7
        %v806 = vrot.slane %v805, 2
        %v807 = vrot.slane %v556, 7
        %v808 = vrot.slane %v807, 2
        %v809 = vrot.slane %v555, 7
        %v810 = vrot.slane %v809, 2
        %v811 = vrot.slane %v557, 7
        %v812 = vrot.slane %v811, 2
        %v813 = vrot.slane %v565, 7
        %v814 = vrot.slane %v813, 2
        %v815 = vrot.slane %v573, 7
        %v816 = vrot.slane %v815, 2
        %v817 = vrot.slane %v572, 7
        %v818 = vrot.slane %v817, 2
        %v819 = vrot.slane %v574, 7
        %v820 = vrot.slane %v819, 2
        %v821 = vrot.slane %v582, 7
        %v822 = vrot.slane %v821, 2
        %v823 = vrot.slane %v590, 7
        %v824 = vrot.slane %v823, 2
        %v825 = vrot.slane %v589, 7
        %v826 = vrot.slane %v825, 2
        %v827 = vrot.slane %v591, 7
        %v828 = vrot.slane %v827, 2
        %v829 = vrot.slane %v599, 7
        %v830 = vrot.slane %v829, 2
        %v831 = vrot.slane %v607, 7
        %v832 = vrot.slane %v831, 2
        %v833 = vrot.slane %v606, 7
        %v834 = vrot.slane %v833, 2
        %v835 = vrot.slane %v608, 7
        %v836 = vrot.slane %v835, 2
        %v837 = vrot.slane %v616, 7
        %v838 = vrot.slane %v837, 2
        %v839 = vrot.slane %v624, 7
        %v840 = vrot.slane %v839, 2
        %v841 = vrot.slane %v623, 7
        %v842 = vrot.slane %v841, 2
        %v843 = vrot.slane %v625, 7
        %v844 = vrot.slane %v843, 2
        %v845 = vrot.slane %v633, 7
        %v846 = vrot.slane %v845, 2
        %v847 = vrot.slane %v641, 7
        %v848 = vrot.slane %v847, 2
        %v849 = vrot.slane %v640, 7
        %v850 = vrot.slane %v849, 2
        %v851 = vrot.slane %v642, 7
        %v852 = vrot.slane %v851, 2
        %v853 = vrot.slane %v650, 7
        %v854 = vrot.slane %v853, 2
        %v855 = vrot.slane %v658, 7
        %v856 = vrot.slane %v855, 2
        %v857 = vrot.slane %v657, 7
        %v858 = vrot.slane %v857, 2
        %v859 = vrot.slane %v659, 7
        %v860 = vrot.slane %v859, 2
        %v861 = vrot.slane %v667, 7
        %v862 = vrot.slane %v861, 2
        %v863 = vrot.slane %v675, 7
        %v864 = vrot.slane %v863, 2
        %v865 = vrot.slane %v674, 7
        %v866 = vrot.slane %v865, 2
        %v867 = vrot.slane %v676, 7
        %v868 = vrot.slane %v867, 2
        %v933 = vadd.f32 %v412, %v742
        %v934 = vadd.f32 %v420, %v744
        %v935 = vadd.f32 %v419, %v746
        %v936 = vadd.f32 %v421, %v748
        %v937 = vadd.f32 %v429, %v750
        %v938 = vadd.f32 %v437, %v752
        %v939 = vadd.f32 %v436, %v754
        %v940 = vadd.f32 %v438, %v756
        %v941 = vadd.f32 %v446, %v758
        %v942 = vadd.f32 %v454, %v760
        %v943 = vadd.f32 %v453, %v762
        %v944 = vadd.f32 %v455, %v764
        %v945 = vadd.f32 %v463, %v766
        %v946 = vadd.f32 %v471, %v768
        %v947 = vadd.f32 %v470, %v770
        %v948 = vadd.f32 %v472, %v772
        %v949 = vadd.f32 %v480, %v774
        %v950 = vadd.f32 %v488, %v776
        %v951 = vadd.f32 %v487, %v778
        %v952 = vadd.f32 %v489, %v780
        %v953 = vadd.f32 %v497, %v782
        %v954 = vadd.f32 %v505, %v784
        %v955 = vadd.f32 %v504, %v786
        %v956 = vadd.f32 %v506, %v788
        %v957 = vadd.f32 %v514, %v790
        %v958 = vadd.f32 %v522, %v792
        %v959 = vadd.f32 %v521, %v794
        %v960 = vadd.f32 %v523, %v796
        %v961 = vadd.f32 %v531, %v798
        %v962 = vadd.f32 %v539, %v800
        %v963 = vadd.f32 %v538, %v802
        %v964 = vadd.f32 %v540, %v804
        %v965 = vadd.f32 %v548, %v806
        %v966 = vadd.f32 %v556, %v808
        %v967 = vadd.f32 %v555, %v810
        %v968 = vadd.f32 %v557, %v812
        %v969 = vadd.f32 %v565, %v814
        %v970 = vadd.f32 %v573, %v816
        %v971 = vadd.f32 %v572, %v818
        %v972 = vadd.f32 %v574, %v820
        %v973 = vadd.f32 %v582, %v822
        %v974 = vadd.f32 %v590, %v824
        %v975 = vadd.f32 %v589, %v826
        %v976 = vadd.f32 %v591, %v828
        %v977 = vadd.f32 %v599, %v830
        %v978 = vadd.f32 %v607, %v832
        %v979 = vadd.f32 %v606, %v834
        %v980 = vadd.f32 %v608, %v836
        %v981 = vadd.f32 %v616, %v838
        %v982 = vadd.f32 %v624, %v840
        %v983 = vadd.f32 %v623, %v842
        %v984 = vadd.f32 %v625, %v844
        %v985 = vadd.f32 %v633, %v846
        %v986 = vadd.f32 %v641, %v848
        %v987 = vadd.f32 %v640, %v850
        %v988 = vadd.f32 %v642, %v852
        %v989 = vadd.f32 %v650, %v854
        %v990 = vadd.f32 %v658, %v856
        %v991 = vadd.f32 %v657, %v858
        %v992 = vadd.f32 %v659, %v860
        %v993 = vadd.f32 %v667, %v862
        %v994 = vadd.f32 %v675, %v864
        %v995 = vadd.f32 %v674, %v866
        %v996 = vadd.f32 %v676, %v868
        %v997 = vpack.c.bf16 %v933, %v933
        %v998 = vpack.c.bf16 %v934, %v934
        %v999 = vpack.c.bf16 %v935, %v935
        %v1000 = vpack.c.bf16 %v936, %v936
        %v1001 = vpack.c.bf16 %v937, %v937
        %v1002 = vpack.c.bf16 %v938, %v938
        %v1003 = vpack.c.bf16 %v939, %v939
        %v1004 = vpack.c.bf16 %v940, %v940
        %v1005 = vpack.c.bf16 %v941, %v941
        %v1006 = vpack.c.bf16 %v942, %v942
        %v1007 = vpack.c.bf16 %v943, %v943
        %v1008 = vpack.c.bf16 %v944, %v944
        %v1009 = vpack.c.bf16 %v945, %v945
        %v1010 = vpack.c.bf16 %v946, %v946
        %v1011 = vpack.c.bf16 %v947, %v947
        %v1012 = vpack.c.bf16 %v948, %v948
        %v1013 = vpack.c.bf16 %v949, %v949
        %v1014 = vpack.c.bf16 %v950, %v950
        %v1015 = vpack.c.bf16 %v951, %v951
        %v1016 = vpack.c.bf16 %v952, %v952
        %v1017 = vpack.c.bf16 %v953, %v953
        %v1018 = vpack.c.bf16 %v954, %v954
        %v1019 = vpack.c.bf16 %v955, %v955
        %v1020 = vpack.c.bf16 %v956, %v956
        %v1021 = vpack.c.bf16 %v957, %v957
        %v1022 = vpack.c.bf16 %v958, %v958
        %v1023 = vpack.c.bf16 %v959, %v959
        %v1024 = vpack.c.bf16 %v960, %v960
        %v1025 = vpack.c.bf16 %v961, %v961
        %v1026 = vpack.c.bf16 %v962, %v962
        %v1027 = vpack.c.bf16 %v963, %v963
        %v1028 = vpack.c.bf16 %v964, %v964
        %v1029 = vpack.c.bf16 %v965, %v965
        %v1030 = vpack.c.bf16 %v966, %v966
        %v1031 = vpack.c.bf16 %v967, %v967
        %v1032 = vpack.c.bf16 %v968, %v968
        %v1033 = vpack.c.bf16 %v969, %v969
        %v1034 = vpack.c.bf16 %v970, %v970
        %v1035 = vpack.c.bf16 %v971, %v971
        %v1036 = vpack.c.bf16 %v972, %v972
        %v1037 = vpack.c.bf16 %v973, %v973
        %v1038 = vpack.c.bf16 %v974, %v974
        %v1039 = vpack.c.bf16 %v975, %v975
        %v1040 = vpack.c.bf16 %v976, %v976
        %v1041 = vpack.c.bf16 %v977, %v977
        %v1042 = vpack.c.bf16 %v978, %v978
        %v1043 = vpack.c.bf16 %v979, %v979
        %v1044 = vpack.c.bf16 %v980, %v980
        %v1045 = vpack.c.bf16 %v981, %v981
        %v1046 = vpack.c.bf16 %v982, %v982
        %v1047 = vpack.c.bf16 %v983, %v983
        %v1048 = vpack.c.bf16 %v984, %v984
        %v1049 = vpack.c.bf16 %v985, %v985
        %v1050 = vpack.c.bf16 %v986, %v986
        %v1051 = vpack.c.bf16 %v987, %v987
        %v1052 = vpack.c.bf16 %v988, %v988
        %v1053 = vpack.c.bf16 %v989, %v989
        %v1054 = vpack.c.bf16 %v990, %v990
        %v1055 = vpack.c.bf16 %v991, %v991
        %v1056 = vpack.c.bf16 %v992, %v992
        %v1057 = vpack.c.bf16 %v993, %v993
        %v1058 = vpack.c.bf16 %v994, %v994
        %v1059 = vpack.c.bf16 %v995, %v995
        %v1060 = vpack.c.bf16 %v996, %v996
        %v1061 = vld [vmem:[%s3] sm:$0xf]
        %v1126 = vunpack.c.l.b16 %v997
        %v1127 = vunpack.c.l.b16 %v998
        %v1128 = vunpack.c.l.b16 %v999
        %v1129 = vunpack.c.l.b16 %v1000
        %v1130 = vunpack.c.l.b16 %v1001
        %v1131 = vunpack.c.l.b16 %v1002
        %v1132 = vunpack.c.l.b16 %v1003
        %v1133 = vunpack.c.l.b16 %v1004
        %v1134 = vunpack.c.l.b16 %v1005
        %v1135 = vunpack.c.l.b16 %v1006
        %v1136 = vunpack.c.l.b16 %v1007
        %v1137 = vunpack.c.l.b16 %v1008
        %v1138 = vunpack.c.l.b16 %v1009
        %v1139 = vunpack.c.l.b16 %v1010
        %v1140 = vunpack.c.l.b16 %v1011
        %v1141 = vunpack.c.l.b16 %v1012
        %v1142 = vunpack.c.l.b16 %v1013
        %v1143 = vunpack.c.l.b16 %v1014
        %v1144 = vunpack.c.l.b16 %v1015
        %v1145 = vunpack.c.l.b16 %v1016
        %v1146 = vunpack.c.l.b16 %v1017
        %v1147 = vunpack.c.l.b16 %v1018
        %v1148 = vunpack.c.l.b16 %v1019
        %v1149 = vunpack.c.l.b16 %v1020
        %v1150 = vunpack.c.l.b16 %v1021
        %v1151 = vunpack.c.l.b16 %v1022
        %v1152 = vunpack.c.l.b16 %v1023
        %v1153 = vunpack.c.l.b16 %v1024
        %v1154 = vunpack.c.l.b16 %v1025
        %v1155 = vunpack.c.l.b16 %v1026
        %v1156 = vunpack.c.l.b16 %v1027
        %v1157 = vunpack.c.l.b16 %v1028
        %v1158 = vunpack.c.l.b16 %v1029
        %v1159 = vunpack.c.l.b16 %v1030
        %v1160 = vunpack.c.l.b16 %v1031
        %v1161 = vunpack.c.l.b16 %v1032
        %v1162 = vunpack.c.l.b16 %v1033
        %v1163 = vunpack.c.l.b16 %v1034
        %v1164 = vunpack.c.l.b16 %v1035
        %v1165 = vunpack.c.l.b16 %v1036
        %v1166 = vunpack.c.l.b16 %v1037
        %v1167 = vunpack.c.l.b16 %v1038
        %v1168 = vunpack.c.l.b16 %v1039
        %v1169 = vunpack.c.l.b16 %v1040
        %v1170 = vunpack.c.l.b16 %v1041
        %v1171 = vunpack.c.l.b16 %v1042
        %v1172 = vunpack.c.l.b16 %v1043
        %v1173 = vunpack.c.l.b16 %v1044
        %v1174 = vunpack.c.l.b16 %v1045
        %v1175 = vunpack.c.l.b16 %v1046
        %v1176 = vunpack.c.l.b16 %v1047
        %v1177 = vunpack.c.l.b16 %v1048
        %v1178 = vunpack.c.l.b16 %v1049
        %v1179 = vunpack.c.l.b16 %v1050
        %v1180 = vunpack.c.l.b16 %v1051
        %v1181 = vunpack.c.l.b16 %v1052
        %v1182 = vunpack.c.l.b16 %v1053
        %v1183 = vunpack.c.l.b16 %v1054
        %v1184 = vunpack.c.l.b16 %v1055
        %v1185 = vunpack.c.l.b16 %v1056
        %v1186 = vunpack.c.l.b16 %v1057
        %v1187 = vunpack.c.l.b16 %v1058
        %v1188 = vunpack.c.l.b16 %v1059
        %v1189 = vunpack.c.l.b16 %v1060
        %v1190 = vrot.slane %v1127, 7
        %vm1191 = vcmask 1041409
        %v1192 = vsel %vm1191, %v1190, %v1126
        %v1193 = vrot.slane %v1128, 6
        %vm1194 = vcmask 1042434
        %v1195 = vsel %vm1194, %v1193, %v1192
        %v1196 = vrot.slane %v1129, 5
        %vm1197 = vcmask 1043459
        %v1198 = vsel %vm1197, %v1196, %v1195
        %v1199 = vrot.slane %v1130, 4
        %vm1200 = vcmask 1044484
        %v1201 = vsel %vm1200, %v1199, %v1198
        %v1202 = vrot.slane %v1131, 3
        %vm1203 = vcmask 1045509
        %v1204 = vsel %vm1203, %v1202, %v1201
        %v1205 = vrot.slane %v1132, 2
        %vm1206 = vcmask 1046534
        %v1207 = vsel %vm1206, %v1205, %v1204
        %v1208 = vrot.slane %v1133, 1
        %vm1209 = vcmask 1047559
        %v1210 = vsel %vm1209, %v1208, %v1207
        %v1211 = vrot.slane %v1135, 7
        %v1212 = vsel %vm1191, %v1211, %v1134
        %v1213 = vrot.slane %v1136, 6
        %v1214 = vsel %vm1194, %v1213, %v1212
        %v1215 = vrot.slane %v1137, 5
        %v1216 = vsel %vm1197, %v1215, %v1214
        %v1217 = vrot.slane %v1138, 4
        %v1218 = vsel %vm1200, %v1217, %v1216
        %v1219 = vrot.slane %v1139, 3
        %v1220 = vsel %vm1203, %v1219, %v1218
        %v1221 = vrot.slane %v1140, 2
        %v1222 = vsel %vm1206, %v1221, %v1220
        %v1223 = vrot.slane %v1141, 1
        %v1224 = vsel %vm1209, %v1223, %v1222
        %v1225 = vrot.slane %v1143, 7
        %v1226 = vsel %vm1191, %v1225, %v1142
        %v1227 = vrot.slane %v1144, 6
        %v1228 = vsel %vm1194, %v1227, %v1226
        %v1229 = vrot.slane %v1145, 5
        %v1230 = vsel %vm1197, %v1229, %v1228
        %v1231 = vrot.slane %v1146, 4
        %v1232 = vsel %vm1200, %v1231, %v1230
        %v1233 = vrot.slane %v1147, 3
        %v1234 = vsel %vm1203, %v1233, %v1232
        %v1235 = vrot.slane %v1148, 2
        %v1236 = vsel %vm1206, %v1235, %v1234
        %v1237 = vrot.slane %v1149, 1
        %v1238 = vsel %vm1209, %v1237, %v1236
        %v1239 = vrot.slane %v1151, 7
        %v1240 = vsel %vm1191, %v1239, %v1150
        %v1241 = vrot.slane %v1152, 6
        %v1242 = vsel %vm1194, %v1241, %v1240
        %v1243 = vrot.slane %v1153, 5
        %v1244 = vsel %vm1197, %v1243, %v1242
        %v1245 = vrot.slane %v1154, 4
        %v1246 = vsel %vm1200, %v1245, %v1244
        %v1247 = vrot.slane %v1155, 3
        %v1248 = vsel %vm1203, %v1247, %v1246
        %v1249 = vrot.slane %v1156, 2
        %v1250 = vsel %vm1206, %v1249, %v1248
        %v1251 = vrot.slane %v1157, 1
        %v1252 = vsel %vm1209, %v1251, %v1250
        %v1253 = vrot.slane %v1159, 7
        %v1254 = vsel %vm1191, %v1253, %v1158
        %v1255 = vrot.slane %v1160, 6
        %v1256 = vsel %vm1194, %v1255, %v1254
        %v1257 = vrot.slane %v1161, 5
        %v1258 = vsel %vm1197, %v1257, %v1256
        %v1259 = vrot.slane %v1162, 4
        %v1260 = vsel %vm1200, %v1259, %v1258
        %v1261 = vrot.slane %v1163, 3
        %v1262 = vsel %vm1203, %v1261, %v1260
        %v1263 = vrot.slane %v1164, 2
        %v1264 = vsel %vm1206, %v1263, %v1262
        %v1265 = vrot.slane %v1165, 1
        %v1266 = vsel %vm1209, %v1265, %v1264
        %v1267 = vrot.slane %v1167, 7
        %v1268 = vsel %vm1191, %v1267, %v1166
        %v1269 = vrot.slane %v1168, 6
        %v1270 = vsel %vm1194, %v1269, %v1268
        %v1271 = vrot.slane %v1169, 5
        %v1272 = vsel %vm1197, %v1271, %v1270
        %v1273 = vrot.slane %v1170, 4
        %v1274 = vsel %vm1200, %v1273, %v1272
        %v1275 = vrot.slane %v1171, 3
        %v1276 = vsel %vm1203, %v1275, %v1274
        %v1277 = vrot.slane %v1172, 2
        %v1278 = vsel %vm1206, %v1277, %v1276
        %v1279 = vrot.slane %v1173, 1
        %v1280 = vsel %vm1209, %v1279, %v1278
        %v1281 = vrot.slane %v1175, 7
        %v1282 = vsel %vm1191, %v1281, %v1174
        %v1283 = vrot.slane %v1176, 6
        %v1284 = vsel %vm1194, %v1283, %v1282
        %v1285 = vrot.slane %v1177, 5
        %v1286 = vsel %vm1197, %v1285, %v1284
        %v1287 = vrot.slane %v1178, 4
        %v1288 = vsel %vm1200, %v1287, %v1286
        %v1289 = vrot.slane %v1179, 3
        %v1290 = vsel %vm1203, %v1289, %v1288
        %v1291 = vrot.slane %v1180, 2
        %v1292 = vsel %vm1206, %v1291, %v1290
        %v1293 = vrot.slane %v1181, 1
        %v1294 = vsel %vm1209, %v1293, %v1292
        %v1295 = vrot.slane %v1183, 7
        %v1296 = vsel %vm1191, %v1295, %v1182
        %v1297 = vrot.slane %v1184, 6
        %v1298 = vsel %vm1194, %v1297, %v1296
        %v1299 = vrot.slane %v1185, 5
        %v1300 = vsel %vm1197, %v1299, %v1298
        %v1301 = vrot.slane %v1186, 4
        %v1302 = vsel %vm1200, %v1301, %v1300
        %v1303 = vrot.slane %v1187, 3
        %v1304 = vsel %vm1203, %v1303, %v1302
        %v1305 = vrot.slane %v1188, 2
        %v1306 = vsel %vm1206, %v1305, %v1304
        %v1307 = vrot.slane %v1189, 1
        %v1308 = vsel %vm1209, %v1307, %v1306
        %v1309 = vpack.c.b16 %v1224, %v1210
        %v1310 = vpack.c.b16 %v1252, %v1238
        %v1311 = vpack.c.b16 %v1280, %v1266
        %v1312 = vpack.c.b16 %v1308, %v1294
        %vm1313 = vcmask 64512
        %v1315 = vsel %vm1313, %v1309, 0
        %v1318 = vsel %vm1313, %v1310, 0
        %v1321 = vsel %vm1313, %v1311, 0
        %v1324 = vsel %vm1313, %v1312, 0
        %vm1326 = vcmask 1043456
        %v1328 = vsel %vm1326, %v1061, 0
        %1330 = vmatprep.subr.bf16.mxu0 0
        %1331 = vmatpush1.bf16.msra.mxu0 0
        %1332 = vmatprep.subr.bf16.mxu0 0
        %1333 = vmatpush1.bf16.msra.mxu0 0
        %1334 = vmatprep.subr.bf16.mxu0 0
        %1335 = vmatpush1.bf16.msra.mxu0 0
        %1336 = vmatprep.subr.bf16.mxu0 0
        %1337 = vmatpush1.bf16.msra.mxu0 0
        %1338 = vmatprep.subr.bf16.mxu0 0
        %1339 = vmatpush1.bf16.msra.mxu0 0
        %1340 = vmatprep.subr.bf16.mxu0 0
        %1341 = vmatpush1.bf16.msra.mxu0 0
        %1342 = vmatprep.subr.bf16.mxu0 0
        %1343 = vmatpush1.bf16.msra.mxu0 0
        %1344 = vmatprep.subr.bf16.mxu0 0
        %1345 = vmatpush1.bf16.msra.mxu0 %v1328
        %1346 = vmatprep.subr.bf16.mxu0 0
        %1347 = vmatpush2.bf16.msra.mxu0 0
        %1348 = vmatprep.subr.bf16.mxu0 0
        %1349 = vmatpush2.bf16.msra.mxu0 0
        %1350 = vmatprep.subr.bf16.mxu0 0
        %1351 = vmatpush2.bf16.msra.mxu0 0
        %1352 = vmatprep.subr.bf16.mxu0 0
        %1353 = vmatpush2.bf16.msra.mxu0 0
        %1354 = vmatprep.subr.bf16.mxu0 0
        %1355 = vmatpush2.bf16.msra.mxu0 0
        %1356 = vmatprep.subr.bf16.mxu0 0
        %1357 = vmatpush2.bf16.msra.mxu0 0
        %1358 = vmatprep.subr.bf16.mxu0 0
        %1359 = vmatpush2.bf16.msra.mxu0 0
        %1360 = vmatprep.subr.bf16.mxu0 0
        %1361 = vmatpush2.bf16.msra.mxu0 0
        %1362 = vmatprep.mubr.bf16.mxu0 0
        %1363 = vmatmul.mubr.bf16.gmra.mxu0 %v1315
        %v1364 = vpop.f32.mrf.mxu0
        %v1365 = vadd.f32 0.0, %v1364
        %v1366 = vpop.f32.mrf.mxu0
        %v1367 = vpop.f32.mrf.mxu0
        %v1368 = vadd.f32 0.0, %v1367
        %v1369 = vpop.f32.mrf.mxu0
        %1370 = vmatprep.mubr.bf16.mxu0 0
        %1371 = vmatmul.mubr.bf16.gmra.mxu0 %v1318
        %v1372 = vpop.f32.mrf.mxu0
        %v1373 = vadd.f32 0.0, %v1372
        %v1374 = vpop.f32.mrf.mxu0
        %v1375 = vpop.f32.mrf.mxu0
        %v1376 = vadd.f32 0.0, %v1375
        %v1377 = vpop.f32.mrf.mxu0
        %1378 = vmatprep.mubr.bf16.mxu0 0
        %1379 = vmatmul.mubr.bf16.gmra.mxu0 %v1321
        %v1380 = vpop.f32.mrf.mxu0
        %v1381 = vadd.f32 0.0, %v1380
        %v1382 = vpop.f32.mrf.mxu0
        %v1383 = vpop.f32.mrf.mxu0
        %v1384 = vadd.f32 0.0, %v1383
        %v1385 = vpop.f32.mrf.mxu0
        %1386 = vmatprep.mubr.bf16.mxu0 0
        %1387 = vmatmul.mubr.bf16.gmra.mxu0 %v1324
        %v1388 = vpop.f32.mrf.mxu0
        %v1389 = vadd.f32 0.0, %v1388
        %v1390 = vpop.f32.mrf.mxu0
        %v1391 = vpop.f32.mrf.mxu0
        %v1392 = vadd.f32 0.0, %v1391
        %v1393 = vpop.f32.mrf.mxu0
        %1394 = vdwg.mxu0
        %1395 = vst [vmem:[%s217] sm:$0xff] %v1365
        %1396 = vst [vmem:[%s217 + $0x8] sm:$0xff] %v1368
        %1397 = vst [vmem:[%s217 + $0x10] sm:$0xff] %v1373
        %1398 = vst [vmem:[%s217 + $0x18] sm:$0xff] %v1376
        %1399 = vst [vmem:[%s217 + $0x20] sm:$0xff] %v1381
        %1400 = vst [vmem:[%s217 + $0x28] sm:$0xff] %v1384
        %1401 = vst [vmem:[%s217 + $0x30] sm:$0xff] %v1389
        %1402 = vst [vmem:[%s217 + $0x38] sm:$0xff] %v1392
        %s1403 = sand.u32 %s131, 1
        %s1404 = scalar_lea.sflag [#allocation3], %s1403
        %s1405 = sand.u32 %s131, 1
        %s1406 = smul.addr %s1405, 64
        %s1407 = scalar_lea.vmem [#allocation2], %s1406
        // Predicated region
        $region37: #{tpu_custom_call.1} parent=35 // pred_check
          %p1408 = pneg %p141
        $region38: #{tpu_custom_call.1} parent=35 // pred_check_branch
          %1410 = sbr.rel (%p1408) target = $region40
        $region39: #{tpu_custom_call.1} parent=35 // pred_region
          %s1411 = smul.u32 8, %s23
          %s1413 = ssub.s32 1024, 1024
          %1414 = vsyncadd %s1404, %s1413
          %s1415 = smul.addr %s22, 8
          %s1416 = sadd.s32 %s1411, %s1415
          %s1417 = smul.addr %s1416, 128
          %s1418 = scalar_lea.hbm %s4, %s1417
          %s1419 = sshll.u32 %s1407, 4
          %s1420 = int_to_ptr.vmem [resolvable:$true] %s1419
          %1425 = dma.vmem_to_hbm [thread:$0]  %s1420, 1024, %s1418, %s1404, 128, 128, 8
        $region40: #{tpu_custom_call.1} parent=35 // pred_fallthru
          _
      $region36: #{tpu_custom_call.1} parent=5 // pred_fallthru
        _
      %p1426 = scmp.le.s32.totalorder 2, %s13
      // Predicated region
      $region41: #{tpu_custom_call.1} parent=5 // pred_check
        %p1427 = pneg %p1426
      $region42: #{tpu_custom_call.1} parent=5 // pred_check_branch
        %1429 = sbr.rel (%p1427) target = $region44
      $region43: #{tpu_custom_call.1} parent=5 // pred_region
        %s1430 = ssub.s32 %s13, 2
        // Predicated region
        $region45: #{tpu_custom_call.1} parent=43 // pred_check
          %p1431 = pneg %p147
        $region46: #{tpu_custom_call.1} parent=43 // pred_check_branch
          %1433 = sbr.rel (%p1431) target = $region48
        $region47: #{tpu_custom_call.1} parent=43 // pred_region
          %s1434 = sand.u32 %s132, 1
          %s1435 = scalar_lea.sflag [#allocation3], %s1434
          %s1436 = sand.u32 %s132, 1
          %s1437 = smul.addr %s1436, 64
          %s1438 = scalar_lea.vmem [#allocation2], %s1437
          %1439 = dma.done %s1435, 1024
        $region48: #{tpu_custom_call.1} parent=43 // pred_fallthru
          _
      $region44: #{tpu_custom_call.1} parent=5 // pred_fallthru
        _
    $region6: #{tpu_custom_call.1} parent=1 // loop_footer
      %s17 = sadd.s32 1, %s13
    $region7: #{tpu_custom_call.1} parent=1 // loop_footer_branch
      %12 = sbr.rel target = $region3
    $region8: #{tpu_custom_call.1} parent=1 // loop_exit
      _
    %1440 = vsyncpa [#allocation3], 1
    %s1441 = scalar_lea.sflag [#allocation3], 1
    %1442 = vsyncpa %s1441, 1

</llo_original>
